<compile_context>
chip_gen: v6e
topology: v6e:2x2x1
jax: 0.10.0
libtpu: 0.0.40
codegen_flags: <defaults>
</compile_context>

<pallas_src>
import math
from functools import partial

import jax
import jax.numpy as jnp
from jax import lax
from jax.experimental import pallas as pl
from jax.experimental.pallas import tpu as pltpu


TEMP_MASK = 1.0
_INV_TEMP_MASK = 1.0 / TEMP_MASK
_LOG2E = math.log2(math.e)
# bin_score / temp_score only matter for the 'sinkhorn' / 'dual_softmax' /
# 'cosine' transport branches, which are inactive for transport=None.


def _svd_head_kernel(es_ref, et_ref, ps_ref, pt_ref, out_ref, m_sc, acc_sc,
                     *, m_total, ragged, exp_in_bf16):
    """Online-softmax accumulation over M tiles; finalize on the last tile.

    es_ref : (bt, D, N)  bf16, pre-scaled by log2(e)/sqrt(D)  (exp2 softmax)
    et_ref : (bt, D, tm) bf16
    ps_ref : (bt, 5, N)  f32   rows = [xyz | depth_mask | img_mask]
    pt_ref : (bt, 6, tm) bf16  rows = [xyz | depth_mask | img_mask | ones]
    out_ref: (bt, 3, 5)  f32   lanes = [H (3x3) | src_mean | corr_mean]
    m_sc   : (bt, 1, N)  f32   running row max (log2 domain)
    acc_sc : (bt, 6, N)  f32   running [corr | depth | img | sum-of-p]
    """
    mi = pl.program_id(1)
    tm = et_ref.shape[2]

    @pl.when(mi == 0)
    def _init():
        m_sc[...] = jnp.full(m_sc.shape, -jnp.inf, dtype=jnp.float32)
        acc_sc[...] = jnp.zeros(acc_sc.shape, dtype=jnp.float32)

    e_src = es_ref[...]            # (bt, D, N)  bf16
    e_tgt = et_ref[...]            # (bt, D, tm) bf16
    tgt_ext = pt_ref[...]          # (bt, 6, tm) bf16

    # logits in (tm, N) orientation: the softmax axis (M) is second-minor so
    # every per-point row vector below is lane-dense (1, N). No transposes.
    logits = lax.dot_general(
        e_tgt, e_src,
        dimension_numbers=(((1,), (1,)), ((0,), (0,))),   # contract D, batch B
        preferred_element_type=jnp.float32)               # (bt, tm, N)

    if ragged:
        # Tail block overruns M: mask the invalid (stale / unspecified) columns
        # out of both the logits and the tgt slab (jnp.where is NaN-safe).
        col_l = mi * tm + lax.broadcasted_iota(jnp.int32, (1, tm, 1), 1)
        logits = jnp.where(col_l < m_total, logits, -jnp.inf)
        col_t = mi * tm + lax.broadcasted_iota(jnp.int32, (1, 1, tm), 2)
        tgt_ext = jnp.where(col_t < m_total, tgt_ext, jnp.zeros_like(tgt_ext))

    m_prev = m_sc[...]                                    # (bt, 1, N)
    m_new = jnp.maximum(m_prev, jnp.max(logits, axis=1, keepdims=True))
    alpha = jnp.exp2(m_prev - m_new)                      # f32, tiny
    if exp_in_bf16:
        # v6e/v7x: bf16 EUP path roughly halves the saturating exp cost.
        p = jnp.exp2((logits - m_new).astype(jnp.bfloat16))      # (bt, tm, N)
    else:
        # v5e/v4: no bf16 EUP; exp in f32, cast only for the MXU.
        p = jnp.exp2(logits - m_new).astype(jnp.bfloat16)

    # One fused native-bf16 matmul produces [tgt | depth | img | sum(p)]
    # against the probabilities; f32 accumulation via preferred_element_type.
    acc_sc[...] = alpha * acc_sc[...] + lax.dot_general(
        tgt_ext, p,
        dimension_numbers=(((2,), (1,)), ((0,), (0,))),   # contract tm
        preferred_element_type=jnp.float32)               # (bt, 6, N)
    m_sc[...] = m_new

    @pl.when(mi == pl.num_programs(1) - 1)
    def _finalize():
        src_ext = ps_ref[...]                             # (bt, 5, N) f32
        inv_l = pl.reciprocal(acc_sc[:, 5:6, :], approx=True)   # 1 / sum(p)
        corr_ext = acc_sc[:, 0:5, :] * inv_l              # (bt, 5, N)

        depth_mask = 0.5 * (src_ext[:, 3:4, :] + corr_ext[:, 3:4, :])
        img_mask = 0.5 * (src_ext[:, 4:5, :] + corr_ext[:, 4:5, :])
        # mask == 'both'
        mask = (jax.nn.sigmoid(depth_mask * _INV_TEMP_MASK) *
                jax.nn.sigmoid(img_mask * _INV_TEMP_MASK))    # (bt, 1, N)
        m_min = jnp.min(mask, axis=-1, keepdims=True)
        m_max = jnp.max(mask, axis=-1, keepdims=True)
        mask = (mask - m_min) * pl.reciprocal(
            jnp.maximum(m_max - m_min, 1e-6), approx=True)

        src = src_ext[:, 0:3, :]                          # (bt, 3, N)
        corr = corr_ext[:, 0:3, :]                        # (bt, 3, N)
        inv_n = 1.0 / src.shape[-1]
        src_mean = jnp.sum(src, axis=-1, keepdims=True) * inv_n    # (bt, 3, 1)
        corr_mean = jnp.sum(corr, axis=-1, keepdims=True) * inv_n
        src_c = src - src_mean
        corr_c = corr - corr_mean

        # H = src_centered @ diag(mask) @ src_corr_centered^T -> (bt, 3, 3)
        h = lax.dot_general(
            src_c * mask, corr_c,
            dimension_numbers=(((2,), (2,)), ((0,), (0,))),   # contract N
            preferred_element_type=jnp.float32)
        out_ref[:, :, 0:3] = h
        out_ref[:, :, 3:4] = src_mean
        out_ref[:, :, 4:5] = corr_mean


def _has_bf16_transcendental():
    """True on chips with a bf16 EUP path (v6e / v7x)."""
    try:
        kind = jax.devices()[0].device_kind.lower()
    except Exception:
        return False
    return any(tag in kind for tag in ("v6", "v7", "7x"))


def _vmem_limit_bytes():
    """Generation-aware scoped-VMEM request: 64 MiB on 128-MiB parts
    (v5e/v6e), capacity minus headroom (~56 MiB) on 64-MiB v7x parts."""
    cap = 64 * 1024 * 1024        # conservative fallback (v7x physical VMEM)
    try:
        cap = int(pltpu.get_tpu_info().vmem_capacity_bytes)
    except Exception:
        pass
    return min(64 * 1024 * 1024, max(cap - 8 * 1024 * 1024, 16 * 1024 * 1024))


def _choose_tiles(B, D, N, M, vmem_limit, *, batch_tile=None, m_tile=None):
    """Jointly pick (batch_tile, m_tile) against one combined VMEM budget that
    accounts for double-buffered input tiles, sublane padding, scratch and the
    compiler-materialized (bt, tm, N) logits / probability temporaries."""
    budget = int(vmem_limit * 0.7)

    def usage(bt, tm):
        es = 2 * bt * D * N * 2          # bf16 src-emb tile, double-buffered
        et = 2 * bt * D * tm * 2         # bf16 tgt-emb tile
        ps = 2 * bt * 8 * N * 4          # f32 src slab (5 sublanes pad to 8)
        pt = 2 * bt * 8 * tm * 2         # bf16 tgt slab (6 -> 8 sublanes)
        scr = 2 * bt * 8 * N * 4         # m_sc + acc_sc (sublane padded)
        tmp = 3 * bt * tm * N * 4        # logits (f32) + p + headroom
        return es + et + ps + pt + scr + tmp

    # Cap bt so the 'parallel' bi axis keeps >= 2 steps (v7x megacore).
    bt_cap = min(8, max(1, B // 2))
    if batch_tile is not None:
        bt_cands = [batch_tile]
    else:
        bt_cands = [bt for bt in (8, 4, 2, 1) if bt <= bt_cap and B % bt == 0]
        bt_cands = bt_cands or [1]

    if m_tile is not None:
        tm_cands = [m_tile]
    elif M > 128 and M % 128 == 0:
        tm_cands = [c for c in (2048, 1024, 512, 256, 128) if M % c == 0]
    elif M > 512:
        # Large ragged M: tile anyway (pl.cdiv grid + in-kernel tail masking).
        tm_cands = [c for c in (2048, 1024, 512, 256, 128) if c < M]
    else:
        tm_cands = [M]                   # small / ragged M: single block

    for bt in bt_cands:
        for tm in tm_cands:
            if usage(bt, tm) <= budget:
                return bt, tm, (M % tm != 0)
    bt, tm = bt_cands[-1], tm_cands[-1]
    return bt, tm, (M % tm != 0)


def _pallas_core(src_emb, tgt_emb, src, tgt, src_dm, tgt_dm, src_im, tgt_im,
                 *, batch_tile=None, m_tile=None):
    B, D, N = src_emb.shape
    M = tgt_emb.shape[2]

    # Fold the 1/sqrt(d_k) softmax scale and log2(e) (kernel softmax runs in
    # the exp2 domain) into src_emb; feed the MXU in bf16.
    es = (src_emb * (_LOG2E / math.sqrt(D))).astype(jnp.bfloat16)
    et = tgt_emb.astype(jnp.bfloat16)

    # Point slabs: src side [xyz | depth | img] stays f32 (used in the f32
    # finalize); tgt side [xyz | depth | img | ones] is bf16 so the
    # probability/PV matmul runs natively on the bf16 MXU, with the ones row
    # producing the softmax denominator from the same matmul.
    pts_src = jnp.concatenate([src, src_dm, src_im], axis=1).astype(jnp.float32)
    pts_tgt = jnp.concatenate(
        [tgt, tgt_dm, tgt_im, jnp.ones((B, 1, M), jnp.float32)],
        axis=1).astype(jnp.bfloat16)

    vmem_limit = _vmem_limit_bytes()
    bt, tm, ragged = _choose_tiles(B, D, N, M, vmem_limit,
                                   batch_tile=batch_tile, m_tile=m_tile)
    assert B % bt == 0
    grid = (B // bt, pl.cdiv(M, tm))

    kernel = partial(_svd_head_kernel, m_total=M, ragged=ragged,
                     exp_in_bf16=_has_bf16_transcendental())

    packed = pl.pallas_call(
        kernel,
        out_shape=jax.ShapeDtypeStruct((B, 3, 5), jnp.float32),
        grid_spec=pltpu.PrefetchScalarGridSpec(
            num_scalar_prefetch=0,
            grid=grid,
            in_specs=[
                pl.BlockSpec((bt, D, N), lambda bi, mi: (bi, 0, 0)),
                pl.BlockSpec((bt, D, tm), lambda bi, mi: (bi, 0, mi)),
                pl.BlockSpec((bt, 5, N), lambda bi, mi: (bi, 0, 0)),
                pl.BlockSpec((bt, 6, tm), lambda bi, mi: (bi, 0, mi)),
            ],
            out_specs=pl.BlockSpec((bt, 3, 5), lambda bi, mi: (bi, 0, 0)),
            scratch_shapes=[
                pltpu.VMEM((bt, 1, N), jnp.float32),   # running row max
                pltpu.VMEM((bt, 6, N), jnp.float32),   # fused accumulator
            ],
        ),
        compiler_params=pltpu.CompilerParams(
            dimension_semantics=("parallel", "arbitrary"),
            vmem_limit_bytes=vmem_limit,
        ),
    )(es, et, pts_src, pts_tgt)

    return packed[:, :, 0:3], packed[:, :, 3:4], packed[:, :, 4:5]


def svd_head_mask_forward(src_emb, tgt_emb, src, tgt,
                          src_dm, tgt_dm, src_im, tgt_im):
    B = src.shape[0]
    H, src_mean, corr_mean = _pallas_core(
        src_emb, tgt_emb, src, tgt, src_dm, tgt_dm, src_im, tgt_im)

    # TODO(synk): 3x3 SVD / det / reflection fix has no Pallas primitive; plain JAX.
    u, s, vh = jnp.linalg.svd(H)
    v = jnp.swapaxes(vh, -1, -2)
    ut = jnp.swapaxes(u, -1, -2)
    r = v @ ut
    det = jnp.linalg.det(r)
    reflect = jnp.diag(jnp.array([1.0, 1.0, -1.0], dtype=jnp.float32))
    r_reflected = v @ reflect @ ut
    R = jnp.where((det < 0.0)[:, None, None], r_reflected, r)
    t = (-R @ src_mean + corr_mean).reshape(B, 3)
    return R, t


def _reference_core(src_emb, tgt_emb, src, tgt, src_dm, tgt_dm, src_im, tgt_im):
    """Pure-JAX reference of the kernel outputs (H, src_mean, corr_mean).

    Applies the same bf16 rounding of the embeddings / tgt-side points as the
    kernel so the check measures kernel bugs rather than the deliberate
    precision choices (the bf16 probability tile remains an intentional
    approximation covered by the test tolerance)."""
    D = src_emb.shape[1]
    f32 = lambda x: x.astype(jnp.bfloat16).astype(jnp.float32)
    es = f32(src_emb * (_LOG2E / math.sqrt(D)))
    et = f32(tgt_emb)
    logits2 = jnp.einsum('bdn,bdm->bnm', es, et)
    scores = jax.nn.softmax(logits2 * math.log(2.0), axis=2)  # 2^x == e^(x ln2)
    st = jnp.swapaxes(scores, 1, 2)
    src_corr = jnp.matmul(f32(tgt), st)
    tgt_dm_p = jnp.matmul(f32(tgt_dm), st)
    tgt_im_p = jnp.matmul(f32(tgt_im), st)
    depth_mask = 0.5 * (src_dm + tgt_dm_p)[:, 0, :]
    img_mask = 0.5 * (src_im + tgt_im_p)[:, 0, :]
    mask = (jax.nn.sigmoid(depth_mask / TEMP_MASK) *
            jax.nn.sigmoid(img_mask / TEMP_MASK))
    m_min = jnp.min(mask, axis=-1, keepdims=True)
    m_max = jnp.max(mask, axis=-1, keepdims=True)
    mask = (mask - m_min) / jnp.maximum(m_max - m_min, 1e-6)
    src_mean = jnp.mean(src, axis=2, keepdims=True)
    corr_mean = jnp.mean(src_corr, axis=2, keepdims=True)
    src_c = src - src_mean
    corr_c = src_corr - corr_mean
    H = jnp.matmul(src_c * mask[:, None, :], jnp.swapaxes(corr_c, 1, 2))
    return H, src_mean, corr_mean


if __name__ == "__main__":
    B, D, N, M = 2, 32, 128, 256
    key = jax.random.PRNGKey(0)
    keys = jax.random.split(key, 12)
    src_emb = jax.random.normal(keys[0], (B, D, N), jnp.float32)
    tgt_emb = jax.random.normal(keys[1], (B, D, M), jnp.float32)
    src = jax.random.normal(keys[2], (B, 3, N), jnp.float32)
    tgt = jax.random.normal(keys[3], (B, 3, M), jnp.float32)
    src_dm = jax.random.normal(keys[4], (B, 1, N), jnp.float32)
    tgt_dm = jax.random.normal(keys[5], (B, 1, M), jnp.float32)
    src_im = jax.random.normal(keys[6], (B, 1, N), jnp.float32)
    tgt_im = jax.random.normal(keys[7], (B, 1, M), jnp.float32)

    R, t = svd_head_mask_forward(src_emb, tgt_emb, src, tgt,
                                 src_dm, tgt_dm, src_im, tgt_im)
    jax.block_until_ready((R, t))
    assert R.shape == (B, 3, 3) and t.shape == (B, 3)

    # Sanity check vs pure-JAX reference: auto tiling and a forced 2-tile M
    # split (exercises the online-softmax accumulation path).
    H_r, sm_r, cm_r = _reference_core(src_emb, tgt_emb, src, tgt,
                                      src_dm, tgt_dm, src_im, tgt_im)
    for kwargs in ({}, {"m_tile": 128}):
        H_k, sm_k, cm_k = _pallas_core(src_emb, tgt_emb, src, tgt,
                                       src_dm, tgt_dm, src_im, tgt_im, **kwargs)
        jax.block_until_ready((H_k, sm_k, cm_k))
        assert jnp.allclose(H_k, H_r, rtol=3e-2, atol=5e-2), kwargs
        assert jnp.allclose(sm_k, sm_r, rtol=3e-2, atol=5e-2), kwargs
        assert jnp.allclose(cm_k, cm_r, rtol=3e-2, atol=5e-2), kwargs

    # Ragged M (M % 128 != 0) with a forced m tile: exercises the pl.cdiv grid
    # + in-kernel tail-masking path.
    M2 = 200
    tgt_emb2 = jax.random.normal(keys[8], (B, D, M2), jnp.float32)
    tgt2 = jax.random.normal(keys[9], (B, 3, M2), jnp.float32)
    tgt_dm2 = jax.random.normal(keys[10], (B, 1, M2), jnp.float32)
    tgt_im2 = jax.random.normal(keys[11], (B, 1, M2), jnp.float32)
    H_r2, sm_r2, cm_r2 = _reference_core(src_emb, tgt_emb2, src, tgt2,
                                         src_dm, tgt_dm2, src_im, tgt_im2)
    H_k2, sm_k2, cm_k2 = _pallas_core(src_emb, tgt_emb2, src, tgt2,
                                      src_dm, tgt_dm2, src_im, tgt_im2,
                                      m_tile=128)
    jax.block_until_ready((H_k2, sm_k2, cm_k2))
    assert jnp.allclose(H_k2, H_r2, rtol=3e-2, atol=5e-2)
    assert jnp.allclose(sm_k2, sm_r2, rtol=3e-2, atol=5e-2)
    assert jnp.allclose(cm_k2, cm_r2, rtol=3e-2, atol=5e-2)

    print("KERNEL_OK")
</pallas_src>

<mosaic_0001>
module attributes {stable_mosaic.version = 11 : i64} {
  func.func @_svd_head_kernel(%arg0: i32, %arg1: i32, %arg2: memref<1x32x128xbf16, #tpu.memory_space<vmem>>, %arg3: memref<1x32x256xbf16, #tpu.memory_space<vmem>>, %arg4: memref<1x5x128xf32, #tpu.memory_space<vmem>>, %arg5: memref<1x6x256xbf16, #tpu.memory_space<vmem>>, %arg6: memref<1x3x5xf32, #tpu.memory_space<vmem>>, %arg7: memref<1x1x128xf32, #tpu.memory_space<vmem>>, %arg8: memref<1x6x128xf32, #tpu.memory_space<vmem>>) attributes {dimension_semantics = [#tpu.dimension_semantics<parallel>, #tpu.dimension_semantics<arbitrary>], iteration_bounds = array<i64: 2, 1>, scalar_prefetch = 0 : i64, scratch_operands = 2 : i64, tpu.core_type = #tpu.core_type<tc>, window_params = [{transform_indices = @transform_0, window_bounds = array<i64: 1, 32, 128>}, {transform_indices = @transform_1, window_bounds = array<i64: 1, 32, 256>}, {transform_indices = @transform_2, window_bounds = array<i64: 1, 5, 128>}, {transform_indices = @transform_3, window_bounds = array<i64: 1, 6, 256>}, {transform_indices = @transform_4, window_bounds = array<i64: 1, 3, 5>}]} {
    %c0_i32 = arith.constant 0 : i32
    %0 = arith.cmpi eq, %arg1, %c0_i32 : i32
    %1 = arith.extui %0 : i1 to i32
    %c0_i32_0 = arith.constant 0 : i32
    %2 = arith.cmpi ne, %1, %c0_i32_0 : i32
    scf.if %2 {
      %cst_25 = arith.constant 0xFF800000 : f32
      %27 = vector.broadcast %cst_25 : f32 to vector<1x1x128xf32>
      %c0_26 = arith.constant 0 : index
      %c0_27 = arith.constant 0 : index
      %c0_28 = arith.constant 0 : index
      %28 = vector.load %arg7[%c0_26, %c0_27, %c0_28] : memref<1x1x128xf32, #tpu.memory_space<vmem>>, vector<1x1x128xf32>
      tpu.vector_store %arg7[%c0_26, %c0_27, %c0_28], %27 {strides = array<i32>} : memref<1x1x128xf32, #tpu.memory_space<vmem>>, vector<1x1x128xf32>,
      %cst_29 = arith.constant 0.000000e+00 : f32
      %29 = vector.broadcast %cst_29 : f32 to vector<1x6x128xf32>
      %c0_30 = arith.constant 0 : index
      %c0_31 = arith.constant 0 : index
      %c0_32 = arith.constant 0 : index
      %30 = vector.load %arg8[%c0_30, %c0_31, %c0_32] : memref<1x6x128xf32, #tpu.memory_space<vmem>>, vector<1x6x128xf32>
      tpu.vector_store %arg8[%c0_30, %c0_31, %c0_32], %29 {strides = array<i32>} : memref<1x6x128xf32, #tpu.memory_space<vmem>>, vector<1x6x128xf32>,
    } else {
    }
    %c0 = arith.constant 0 : index
    %c0_1 = arith.constant 0 : index
    %c0_2 = arith.constant 0 : index
    %3 = vector.load %arg2[%c0, %c0_1, %c0_2] : memref<1x32x128xbf16, #tpu.memory_space<vmem>>, vector<1x32x128xbf16>
    %c0_3 = arith.constant 0 : index
    %c0_4 = arith.constant 0 : index
    %c0_5 = arith.constant 0 : index
    %4 = vector.load %arg3[%c0_3, %c0_4, %c0_5] : memref<1x32x256xbf16, #tpu.memory_space<vmem>>, vector<1x32x256xbf16>
    %c0_6 = arith.constant 0 : index
    %c0_7 = arith.constant 0 : index
    %c0_8 = arith.constant 0 : index
    %5 = vector.load %arg5[%c0_6, %c0_7, %c0_8] : memref<1x6x256xbf16, #tpu.memory_space<vmem>>, vector<1x6x256xbf16>
    %cst = arith.constant dense<0.000000e+00> : vector<1x256x128xf32>
    %6 = tpu.matmul %4, %3, %cst {dimension_numbers = #tpu.dot_dimension_numbers<[1], [1], [2], [2], [0, 0, 0, 2, 1, 2], [0], [0]>} : vector<1x32x256xbf16>, vector<1x32x128xbf16>, vector<1x256x128xf32> -> vector<1x256x128xf32>
    %c0_9 = arith.constant 0 : index
    %c0_10 = arith.constant 0 : index
    %c0_11 = arith.constant 0 : index
    %7 = vector.load %arg7[%c0_9, %c0_10, %c0_11] : memref<1x1x128xf32, #tpu.memory_space<vmem>>, vector<1x1x128xf32>
    %cst_12 = arith.constant dense<0xFF800000> : vector<1x128xf32>
    %8 = vector.multi_reduction <maximumf>, %6, %cst_12 [1] : vector<1x256x128xf32> to vector<1x128xf32>
    %9 = vector.shape_cast %8 : vector<1x128xf32> to vector<1x1x128xf32>
    %10 = arith.maximumf %7, %9 : vector<1x1x128xf32>
    %11 = arith.subf %7, %10 : vector<1x1x128xf32>
    %12 = math.exp2 %11 : vector<1x1x128xf32>
    %13 = vector.broadcast %10 : vector<1x1x128xf32> to vector<1x256x128xf32>
    %14 = arith.subf %6, %13 : vector<1x256x128xf32>
    %15 = math.exp2 %14 : vector<1x256x128xf32>
    %16 = arith.truncf %15 : vector<1x256x128xf32> to vector<1x256x128xbf16>
    %c0_13 = arith.constant 0 : index
    %c0_14 = arith.constant 0 : index
    %c0_15 = arith.constant 0 : index
    %17 = vector.load %arg8[%c0_13, %c0_14, %c0_15] : memref<1x6x128xf32, #tpu.memory_space<vmem>>, vector<1x6x128xf32>
    %18 = vector.broadcast %12 : vector<1x1x128xf32> to vector<1x6x128xf32>
    %19 = arith.mulf %18, %17 : vector<1x6x128xf32>
    %cst_16 = arith.constant dense<0.000000e+00> : vector<1x6x128xf32>
    %20 = tpu.matmul %5, %16, %cst_16 {dimension_numbers = #tpu.dot_dimension_numbers<[2], [1], [1], [2], [0, 0, 0, 1, 1, 2], [0], [0]>} : vector<1x6x256xbf16>, vector<1x256x128xbf16>, vector<1x6x128xf32> -> vector<1x6x128xf32>
    %21 = arith.addf %19, %20 : vector<1x6x128xf32>
    %c0_17 = arith.constant 0 : index
    %c0_18 = arith.constant 0 : index
    %c0_19 = arith.constant 0 : index
    %22 = vector.load %arg8[%c0_17, %c0_18, %c0_19] : memref<1x6x128xf32, #tpu.memory_space<vmem>>, vector<1x6x128xf32>
    tpu.vector_store %arg8[%c0_17, %c0_18, %c0_19], %21 {strides = array<i32>} : memref<1x6x128xf32, #tpu.memory_space<vmem>>, vector<1x6x128xf32>,
    %c0_20 = arith.constant 0 : index
    %c0_21 = arith.constant 0 : index
    %c0_22 = arith.constant 0 : index
    %23 = vector.load %arg7[%c0_20, %c0_21, %c0_22] : memref<1x1x128xf32, #tpu.memory_space<vmem>>, vector<1x1x128xf32>
    tpu.vector_store %arg7[%c0_20, %c0_21, %c0_22], %10 {strides = array<i32>} : memref<1x1x128xf32, #tpu.memory_space<vmem>>, vector<1x1x128xf32>,
    %c0_i32_23 = arith.constant 0 : i32
    %24 = arith.cmpi eq, %arg1, %c0_i32_23 : i32
    %25 = arith.extui %24 : i1 to i32
    %c0_i32_24 = arith.constant 0 : i32
    %26 = arith.cmpi ne, %25, %c0_i32_24 : i32
    scf.if %26 {
      %c0_25 = arith.constant 0 : index
      %c0_26 = arith.constant 0 : index
      %c0_27 = arith.constant 0 : index
      %27 = vector.load %arg4[%c0_25, %c0_26, %c0_27] : memref<1x5x128xf32, #tpu.memory_space<vmem>>, vector<1x5x128xf32>
      %c0_28 = arith.constant 0 : index
      %c5 = arith.constant 5 : index
      %c0_29 = arith.constant 0 : index
      %28 = vector.load %arg8[%c0_28, %c5, %c0_29] : memref<1x6x128xf32, #tpu.memory_space<vmem>>, vector<1x1x128xf32>
      %29 = tpu.reciprocal %28 {approx = true} : vector<1x1x128xf32> -> vector<1x1x128xf32>
      %c0_30 = arith.constant 0 : index
      %c0_31 = arith.constant 0 : index
      %c0_32 = arith.constant 0 : index
      %30 = vector.load %arg8[%c0_30, %c0_31, %c0_32] : memref<1x6x128xf32, #tpu.memory_space<vmem>>, vector<1x5x128xf32>
      %31 = vector.broadcast %29 : vector<1x1x128xf32> to vector<1x5x128xf32>
      %32 = arith.mulf %30, %31 : vector<1x5x128xf32>
      %33 = vector.extract_strided_slice %27 {offsets = [0, 3, 0], sizes = [1, 1, 128], strides = [1, 1, 1]} : vector<1x5x128xf32> to vector<1x1x128xf32>
      %34 = vector.extract_strided_slice %32 {offsets = [0, 3, 0], sizes = [1, 1, 128], strides = [1, 1, 1]} : vector<1x5x128xf32> to vector<1x1x128xf32>
      %35 = arith.addf %33, %34 : vector<1x1x128xf32>
      %cst_33 = arith.constant 5.000000e-01 : f32
      %36 = vector.broadcast %cst_33 : f32 to vector<1x1x128xf32>
      %37 = arith.mulf %36, %35 : vector<1x1x128xf32>
      %38 = vector.extract_strided_slice %27 {offsets = [0, 4, 0], sizes = [1, 1, 128], strides = [1, 1, 1]} : vector<1x5x128xf32> to vector<1x1x128xf32>
      %39 = vector.extract_strided_slice %32 {offsets = [0, 4, 0], sizes = [1, 1, 128], strides = [1, 1, 1]} : vector<1x5x128xf32> to vector<1x1x128xf32>
      %40 = arith.addf %38, %39 : vector<1x1x128xf32>
      %cst_34 = arith.constant 5.000000e-01 : f32
      %41 = vector.broadcast %cst_34 : f32 to vector<1x1x128xf32>
      %42 = arith.mulf %41, %40 : vector<1x1x128xf32>
      %cst_35 = arith.constant 1.000000e+00 : f32
      %43 = vector.broadcast %cst_35 : f32 to vector<1x1x128xf32>
      %44 = arith.mulf %37, %43 : vector<1x1x128xf32>
      %45 = arith.negf %44 : vector<1x1x128xf32>
      %46 = math.exp %45 : vector<1x1x128xf32>
      %cst_36 = arith.constant 1.000000e+00 : f32
      %47 = vector.broadcast %cst_36 : f32 to vector<1x1x128xf32>
      %48 = arith.addf %47, %46 : vector<1x1x128xf32>
      %49 = arith.divf %47, %48 : vector<1x1x128xf32>
      %cst_37 = arith.constant 1.000000e+00 : f32
      %50 = vector.broadcast %cst_37 : f32 to vector<1x1x128xf32>
      %51 = arith.mulf %42, %50 : vector<1x1x128xf32>
      %52 = arith.negf %51 : vector<1x1x128xf32>
      %53 = math.exp %52 : vector<1x1x128xf32>
      %cst_38 = arith.constant 1.000000e+00 : f32
      %54 = vector.broadcast %cst_38 : f32 to vector<1x1x128xf32>
      %55 = arith.addf %54, %53 : vector<1x1x128xf32>
      %56 = arith.divf %54, %55 : vector<1x1x128xf32>
      %57 = arith.mulf %49, %56 : vector<1x1x128xf32>
      %cst_39 = arith.constant dense<0x7F800000> : vector<1x1xf32>
      %58 = vector.multi_reduction <minimumf>, %57, %cst_39 [2] : vector<1x1x128xf32> to vector<1x1xf32>
      %59 = vector.shape_cast %58 : vector<1x1xf32> to vector<1x1x1xf32>
      %cst_40 = arith.constant dense<0xFF800000> : vector<1x1xf32>
      %60 = vector.multi_reduction <maximumf>, %57, %cst_40 [2] : vector<1x1x128xf32> to vector<1x1xf32>
      %61 = vector.shape_cast %60 : vector<1x1xf32> to vector<1x1x1xf32>
      %62 = vector.broadcast %59 : vector<1x1x1xf32> to vector<1x1x128xf32>
      %63 = arith.subf %57, %62 : vector<1x1x128xf32>
      %64 = arith.subf %61, %59 : vector<1x1x1xf32>
      %cst_41 = arith.constant 9.99999997E-7 : f32
      %65 = vector.broadcast %cst_41 : f32 to vector<1x1x1xf32>
      %66 = arith.maximumf %64, %65 : vector<1x1x1xf32>
      %67 = tpu.reciprocal %66 {approx = true} : vector<1x1x1xf32> -> vector<1x1x1xf32>
      %68 = vector.broadcast %67 : vector<1x1x1xf32> to vector<1x1x128xf32>
      %69 = arith.mulf %63, %68 : vector<1x1x128xf32>
      %70 = vector.extract_strided_slice %27 {offsets = [0, 0, 0], sizes = [1, 3, 128], strides = [1, 1, 1]} : vector<1x5x128xf32> to vector<1x3x128xf32>
      %71 = vector.extract_strided_slice %32 {offsets = [0, 0, 0], sizes = [1, 3, 128], strides = [1, 1, 1]} : vector<1x5x128xf32> to vector<1x3x128xf32>
      %cst_42 = arith.constant dense<0.000000e+00> : vector<1x3xf32>
      %72 = vector.multi_reduction <add>, %70, %cst_42 [2] : vector<1x3x128xf32> to vector<1x3xf32>
      %73 = vector.shape_cast %72 : vector<1x3xf32> to vector<1x3x1xf32>
      %cst_43 = arith.constant 7.812500e-03 : f32
      %74 = vector.broadcast %cst_43 : f32 to vector<1x3x1xf32>
      %75 = arith.mulf %73, %74 : vector<1x3x1xf32>
      %cst_44 = arith.constant dense<0.000000e+00> : vector<1x3xf32>
      %76 = vector.multi_reduction <add>, %71, %cst_44 [2] : vector<1x3x128xf32> to vector<1x3xf32>
      %77 = vector.shape_cast %76 : vector<1x3xf32> to vector<1x3x1xf32>
      %cst_45 = arith.constant 7.812500e-03 : f32
      %78 = vector.broadcast %cst_45 : f32 to vector<1x3x1xf32>
      %79 = arith.mulf %77, %78 : vector<1x3x1xf32>
      %80 = vector.broadcast %75 : vector<1x3x1xf32> to vector<1x3x128xf32>
      %81 = arith.subf %70, %80 : vector<1x3x128xf32>
      %82 = vector.broadcast %79 : vector<1x3x1xf32> to vector<1x3x128xf32>
      %83 = arith.subf %71, %82 : vector<1x3x128xf32>
      %84 = vector.broadcast %69 : vector<1x1x128xf32> to vector<1x3x128xf32>
      %85 = arith.mulf %81, %84 : vector<1x3x128xf32>
      %cst_46 = arith.constant dense<0.000000e+00> : vector<1x3x3xf32>
      %86 = tpu.matmul %85, %83, %cst_46 {dimension_numbers = #tpu.dot_dimension_numbers<[2], [2], [1], [1], [0, 0, 0, 1, 1, 1], [0], [0]>} : vector<1x3x128xf32>, vector<1x3x128xf32>, vector<1x3x3xf32> -> vector<1x3x3xf32>
      %c0_47 = arith.constant 0 : index
      %c0_48 = arith.constant 0 : index
      %c0_49 = arith.constant 0 : index
      %87 = vector.load %arg6[%c0_47, %c0_48, %c0_49] : memref<1x3x5xf32, #tpu.memory_space<vmem>>, vector<1x3x3xf32>
      tpu.vector_store %arg6[%c0_47, %c0_48, %c0_49], %86 {strides = array<i32>} : memref<1x3x5xf32, #tpu.memory_space<vmem>>, vector<1x3x3xf32>,
      %c0_50 = arith.constant 0 : index
      %c0_51 = arith.constant 0 : index
      %c3 = arith.constant 3 : index
      %88 = vector.load %arg6[%c0_50, %c0_51, %c3] : memref<1x3x5xf32, #tpu.memory_space<vmem>>, vector<1x3x1xf32>
      tpu.vector_store %arg6[%c0_50, %c0_51, %c3], %75 {strides = array<i32>} : memref<1x3x5xf32, #tpu.memory_space<vmem>>, vector<1x3x1xf32>,
      %c0_52 = arith.constant 0 : index
      %c0_53 = arith.constant 0 : index
      %c4 = arith.constant 4 : index
      %89 = vector.load %arg6[%c0_52, %c0_53, %c4] : memref<1x3x5xf32, #tpu.memory_space<vmem>>, vector<1x3x1xf32>
      tpu.vector_store %arg6[%c0_52, %c0_53, %c4], %79 {strides = array<i32>} : memref<1x3x5xf32, #tpu.memory_space<vmem>>, vector<1x3x1xf32>,
    } else {
    }
    return
  }
  func.func @transform_0(%arg0: i32, %arg1: i32) -> (i32, i32, i32) {
    %c0_i32 = arith.constant 0 : i32
    %c0_i32_0 = arith.constant 0 : i32
    %c0_i32_1 = arith.constant 0 : i32
    return %arg0, %c0_i32, %c0_i32_0 : i32, i32, i32
  }
  func.func @transform_1(%arg0: i32, %arg1: i32) -> (i32, i32, i32) {
    %c0_i32 = arith.constant 0 : i32
    %c0_i32_0 = arith.constant 0 : i32
    return %arg0, %c0_i32, %arg1 : i32, i32, i32
  }
  func.func @transform_2(%arg0: i32, %arg1: i32) -> (i32, i32, i32) {
    %c0_i32 = arith.constant 0 : i32
    %c0_i32_0 = arith.constant 0 : i32
    %c0_i32_1 = arith.constant 0 : i32
    return %arg0, %c0_i32, %c0_i32_0 : i32, i32, i32
  }
  func.func @transform_3(%arg0: i32, %arg1: i32) -> (i32, i32, i32) {
    %c0_i32 = arith.constant 0 : i32
    %c0_i32_0 = arith.constant 0 : i32
    return %arg0, %c0_i32, %arg1 : i32, i32, i32
  }
  func.func @transform_4(%arg0: i32, %arg1: i32) -> (i32, i32, i32) {
    %c0_i32 = arith.constant 0 : i32
    %c0_i32_0 = arith.constant 0 : i32
    %c0_i32_1 = arith.constant 0 : i32
    return %arg0, %c0_i32, %c0_i32_0 : i32, i32, i32
  }
}

</mosaic_0001>

<llo_original>
// kernel: tpu_custom_call.1
$region0: #{tpu_custom_call.1}
  #allocation0 [shape = 'u32[]', space=smem, size = 0x4, offset = 0x4, fixed_abs, tag = 'smem constant byte address 0x4 - core index']
  #allocation1 [shape = 'u32[144,128]{1,0:T(1,128)}', space=vmem, size = 0x12000, scoped, tag = 'internal scratch']
  #allocation2 [shape = 'f32[1,1,128]{2,1,0:T(1,128)}', space=vmem, size = 0x200, scoped, tag = 'scratch operand']
  #allocation3 [shape = 'f32[1,6,128]{2,1,0:T(8,128)}', space=vmem, size = 0x1000, scoped, tag = 'scratch operand']
  %s0 = inlined_call_operand.vmem [shape: bf16[2,32,128], index: 0, kind: input, shape index: {}]
  %s1 = inlined_call_operand.hbm [shape: bf16[2,32,256], index: 1, kind: input, shape index: {}]
  %s2 = inlined_call_operand.vmem [shape: f32[2,5,128], index: 2, kind: input, shape index: {}]
  %s3 = inlined_call_operand.vmem [shape: bf16[2,6,256], index: 3, kind: input, shape index: {}]
  %s4 = inlined_call_operand.vmem [shape: f32[2,3,5], index: 4, kind: output, shape index: {}]
  %s5 = sld [smem:[#allocation0]]
  $region61: #{tpu_custom_call.1} parent=0
    _
  %s7 = ssub.s32 1, %s5
  %s8 = scalar_select 0, %s7, %s5
  $region1: #{tpu_custom_call.1} parent=0
    #allocation4 [shape = 'u8[32768]{0}', space=vmem, size = 0x8000, scoped, tag = 'input window, operand 1']
    #allocation5 [shape = 's32[2]{0}', space=sflag, size = 0x8, scoped, tag = 'scoped memory for tpu_custom_call.1']
    %9 = vsyncpa [#allocation5], 0
    %s10 = scalar_lea.sflag [#allocation5], 1
    %11 = vsyncpa %s10, 0
    loop: start=0, step=1, limit=4
    $region2: #{tpu_custom_call.1} parent=1 // loop_pre_header
      _
    $region3: #{tpu_custom_call.1} parent=1 // loop_header
      %s13 = sphi 0, %s17
      %p14 = scmp.ge.s32.totalorder %s13, 4
      %s20 = sphi 0, %s32
      %s21 = sphi 0, %s28
      %s22 = sphi 0, %s20
      %s23 = sphi 0, %s21
      %s24 = sphi 0, %s22
      %s25 = sphi 0, %s23
      %s35 = sphi 0, %s37
      %s38 = sphi 0, %s35
      %s39 = sphi 0, %s38
      %s55 = sphi 0, %s39
      %s63 = sphi 0, %s65
      %s66 = sphi 0, %s63
      %s67 = sphi 0, %s66
      %s83 = sphi 0, %s67
      %s89 = sphi 0, %s91
      %s92 = sphi 0, %s89
      %s93 = sphi 0, %s92
      %s109 = sphi 0, %s93
      %s117 = sphi 0, %s119
      %s120 = sphi 0, %s117
      %s121 = sphi 0, %s120
      %s137 = sphi 0, %s121
      %s143 = sphi 0, %s145
      %s146 = sphi 0, %s143
      %s147 = sphi 0, %s146
      %s163 = sphi 0, %s147
    $region4: #{tpu_custom_call.1} parent=1 // loop_header_branch
      %16 = sbr.rel (%p14) target = $region8
    $region5: #{tpu_custom_call.1} parent=1 // loop_body
      %s18 = ssub.s32 %s13, 1
      %s19 = ssub.s32 %s13, 2
      %s26 = sadd.s32 1, %s21
      %p27 = scmp.ge.s32.totalorder %s26, 1
      %s28 = scalar_select %p27, 0, %s26
      %s29 = sadd.s32 1, %s20
      %s30 = scalar_select %p27, %s29, %s20
      %p31 = scmp.ge.s32.totalorder %s30, 2
      %s32 = scalar_select %p31, 0, %s30
      %s33 = ssub.s32 %s20, %s32
      %p34 = scmp.eq.s32.totalorder %s33, 0
      %s36 = sadd.s32 %s35, 1
      %s37 = scalar_select %p34, %s35, %s36
      %p40 = pneg %p34
      %p41 = scmp.eq.s32.totalorder %s13, 1
      %p42 = por %p40, %p41
      %p43 = scmp.ne.s32.totalorder %s35, %s38
      %p44 = scmp.eq.s32.totalorder %s13, 0
      %p45 = por %p43, %p44
      %p46 = scmp.ne.s32.totalorder %s35, %s38
      %p47 = scmp.eq.s32.totalorder %s18, 1
      %p48 = por %p46, %p47
      %p49 = scmp.ne.s32.totalorder %s38, %s39
      %p50 = scmp.eq.s32.totalorder %s18, 0
      %p51 = por %p49, %p50
      %p52 = scmp.ne.s32.totalorder %s38, %s39
      %p53 = scmp.eq.s32.totalorder %s19, 1
      %p54 = por %p52, %p53
      %p56 = scmp.ne.s32.totalorder %s39, %s55
      %p57 = scmp.eq.s32.totalorder %s19, 0
      %p58 = por %p56, %p57
      %s59 = ssub.s32 %s20, %s32
      %s60 = ssub.s32 %s21, %s28
      %s61 = sor.u32 %s59, %s60
      %p62 = scmp.eq.s32.totalorder %s61, 0
      %s64 = sadd.s32 %s63, 1
      %s65 = scalar_select %p62, %s63, %s64
      %p68 = pneg %p62
      %p69 = scmp.eq.s32.totalorder %s13, 1
      %p70 = por %p68, %p69
      %p71 = scmp.ne.s32.totalorder %s63, %s66
      %p72 = scmp.eq.s32.totalorder %s13, 0
      %p73 = por %p71, %p72
      %p74 = scmp.ne.s32.totalorder %s63, %s66
      %p75 = scmp.eq.s32.totalorder %s18, 1
      %p76 = por %p74, %p75
      %p77 = scmp.ne.s32.totalorder %s66, %s67
      %p78 = scmp.eq.s32.totalorder %s18, 0
      %p79 = por %p77, %p78
      %p80 = scmp.ne.s32.totalorder %s66, %s67
      %p81 = scmp.eq.s32.totalorder %s19, 1
      %p82 = por %p80, %p81
      %p84 = scmp.ne.s32.totalorder %s67, %s83
      %p85 = scmp.eq.s32.totalorder %s19, 0
      %p86 = por %p84, %p85
      %s87 = ssub.s32 %s20, %s32
      %p88 = scmp.eq.s32.totalorder %s87, 0
      %s90 = sadd.s32 %s89, 1
      %s91 = scalar_select %p88, %s89, %s90
      %p94 = pneg %p88
      %p95 = scmp.eq.s32.totalorder %s13, 1
      %p96 = por %p94, %p95
      %p97 = scmp.ne.s32.totalorder %s89, %s92
      %p98 = scmp.eq.s32.totalorder %s13, 0
      %p99 = por %p97, %p98
      %p100 = scmp.ne.s32.totalorder %s89, %s92
      %p101 = scmp.eq.s32.totalorder %s18, 1
      %p102 = por %p100, %p101
      %p103 = scmp.ne.s32.totalorder %s92, %s93
      %p104 = scmp.eq.s32.totalorder %s18, 0
      %p105 = por %p103, %p104
      %p106 = scmp.ne.s32.totalorder %s92, %s93
      %p107 = scmp.eq.s32.totalorder %s19, 1
      %p108 = por %p106, %p107
      %p110 = scmp.ne.s32.totalorder %s93, %s109
      %p111 = scmp.eq.s32.totalorder %s19, 0
      %p112 = por %p110, %p111
      %s113 = ssub.s32 %s20, %s32
      %s114 = ssub.s32 %s21, %s28
      %s115 = sor.u32 %s113, %s114
      %p116 = scmp.eq.s32.totalorder %s115, 0
      %s118 = sadd.s32 %s117, 1
      %s119 = scalar_select %p116, %s117, %s118
      %p122 = pneg %p116
      %p123 = scmp.eq.s32.totalorder %s13, 1
      %p124 = por %p122, %p123
      %p125 = scmp.ne.s32.totalorder %s117, %s120
      %p126 = scmp.eq.s32.totalorder %s13, 0
      %p127 = por %p125, %p126
      %p128 = scmp.ne.s32.totalorder %s117, %s120
      %p129 = scmp.eq.s32.totalorder %s18, 1
      %p130 = por %p128, %p129
      %p131 = scmp.ne.s32.totalorder %s120, %s121
      %p132 = scmp.eq.s32.totalorder %s18, 0
      %p133 = por %p131, %p132
      %p134 = scmp.ne.s32.totalorder %s120, %s121
      %p135 = scmp.eq.s32.totalorder %s19, 1
      %p136 = por %p134, %p135
      %p138 = scmp.ne.s32.totalorder %s121, %s137
      %p139 = scmp.eq.s32.totalorder %s19, 0
      %p140 = por %p138, %p139
      %s141 = ssub.s32 %s20, %s32
      %p142 = scmp.eq.s32.totalorder %s141, 0
      %s144 = sadd.s32 %s143, 1
      %s145 = scalar_select %p142, %s143, %s144
      %p148 = pneg %p142
      %p149 = scmp.eq.s32.totalorder %s13, 1
      %p150 = por %p148, %p149
      %p151 = scmp.ne.s32.totalorder %s143, %s146
      %p152 = scmp.eq.s32.totalorder %s13, 0
      %p153 = por %p151, %p152
      %p154 = scmp.ne.s32.totalorder %s143, %s146
      %p155 = scmp.eq.s32.totalorder %s18, 1
      %p156 = por %p154, %p155
      %p157 = scmp.ne.s32.totalorder %s146, %s147
      %p158 = scmp.eq.s32.totalorder %s18, 0
      %p159 = por %p157, %p158
      %p160 = scmp.ne.s32.totalorder %s146, %s147
      %p161 = scmp.eq.s32.totalorder %s19, 1
      %p162 = por %p160, %p161
      %p164 = scmp.ne.s32.totalorder %s147, %s163
      %p165 = scmp.eq.s32.totalorder %s19, 0
      %p166 = por %p164, %p165
      %p167 = scmp.le.s32.totalorder 1, %s13
      %p168 = scmp.lt.s32.totalorder %s13, 3
      %p169 = pnand %p167, %p168
      %p170 = pneg %p169
      // Predicated region
      $region9: #{tpu_custom_call.1} parent=5 // pred_check
        _
      $region10: #{tpu_custom_call.1} parent=5 // pred_check_branch
        %172 = sbr.rel (%p169) target = $region12
      $region11: #{tpu_custom_call.1} parent=5 // pred_region
        %s173 = ssub.s32 %s13, 1
      $region12: #{tpu_custom_call.1} parent=5 // pred_fallthru
        _
      %p174 = scmp.lt.s32.totalorder %s13, 2
      // Predicated region
      $region13: #{tpu_custom_call.1} parent=5 // pred_check
        %p175 = pneg %p174
      $region14: #{tpu_custom_call.1} parent=5 // pred_check_branch
        %177 = sbr.rel (%p175) target = $region16
      $region15: #{tpu_custom_call.1} parent=5 // pred_region
        // Predicated region
        $region17: #{tpu_custom_call.1} parent=15 // pred_check
          %p178 = pneg %p45
        $region18: #{tpu_custom_call.1} parent=15 // pred_check_branch
          %180 = sbr.rel (%p178) target = $region20
        $region19: #{tpu_custom_call.1} parent=15 // pred_region
          %p181 = scmp.lt.s32.totalorder %s20, 1
          %s182 = scalar_select %p181, %s20, 1
          %s183 = smul.addr %s182, 4
          %s184 = smul.addr %s183, 4
          %s185 = scalar_lea.vmem %s0, %s184
        $region20: #{tpu_custom_call.1} parent=15 // pred_fallthru
          _
        // Predicated region
        $region21: #{tpu_custom_call.1} parent=15 // pred_check
          %p186 = pneg %p73
        $region22: #{tpu_custom_call.1} parent=15 // pred_check_branch
          %188 = sbr.rel (%p186) target = $region24
        $region23: #{tpu_custom_call.1} parent=15 // pred_region
          %s189 = sand.u32 %s63, 1
          %s190 = scalar_lea.sflag [#allocation5], %s189
          %s191 = sand.u32 %s63, 1
          %s192 = smul.addr %s191, 32
          %s193 = scalar_lea.vmem [#allocation4], %s192
          %s194 = smul.u32 2, %s21
          %s196 = ssub.s32 512, 512
          %197 = vsyncadd %s190, %s196
          %s198 = smul.addr %s20, 8
          %s199 = sadd.s32 %s194, %s198
          %s200 = smul.addr %s199, 64
          %s201 = scalar_lea.hbm %s1, %s200
          %s202 = sshll.u32 %s193, 4
          %s203 = int_to_ptr.vmem [resolvable:$true] %s202
          %208 = dma.hbm_to_vmem [thread:$0]  %s201, 512, %s203, %s190, 128, 128, 8
        $region24: #{tpu_custom_call.1} parent=15 // pred_fallthru
          _
        // Predicated region
        $region25: #{tpu_custom_call.1} parent=15 // pred_check
          %p209 = pneg %p99
        $region26: #{tpu_custom_call.1} parent=15 // pred_check_branch
          %211 = sbr.rel (%p209) target = $region28
        $region27: #{tpu_custom_call.1} parent=15 // pred_region
          %p212 = scmp.lt.s32.totalorder %s20, 1
          %s213 = scalar_select %p212, %s20, 1
          %s214 = smul.addr %s213, 8
          %s215 = scalar_lea.vmem %s2, %s214
        $region28: #{tpu_custom_call.1} parent=15 // pred_fallthru
          _
        // Predicated region
        $region29: #{tpu_custom_call.1} parent=15 // pred_check
          %p216 = pneg %p127
        $region30: #{tpu_custom_call.1} parent=15 // pred_check_branch
          %218 = sbr.rel (%p216) target = $region32
        $region31: #{tpu_custom_call.1} parent=15 // pred_region
          %s219 = smul.u32 2, %s21
          %p220 = scmp.lt.s32.totalorder %s20, 1
          %s221 = scalar_select %p220, %s20, 1
          %p222 = scmp.lt.s32.totalorder %s219, 1
          %s223 = scalar_select %p222, %s219, 1
          %s224 = smul.addr %s221, 2
          %s225 = sadd.s32 %s223, %s224
          %s226 = smul.addr %s225, 4
          %s227 = scalar_lea.vmem %s3, %s226
          %s228 = smul.u32 2, %s21
        $region32: #{tpu_custom_call.1} parent=15 // pred_fallthru
          _
      $region16: #{tpu_custom_call.1} parent=5 // pred_fallthru
        _
      %p229 = scmp.le.s32.totalorder 1, %s13
      %p230 = scmp.lt.s32.totalorder %s13, 3
      %p231 = pnand %p229, %p230
      %p232 = pneg %p231
      // Predicated region
      $region33: #{tpu_custom_call.1} parent=5 // pred_check
        _
      $region34: #{tpu_custom_call.1} parent=5 // pred_check_branch
        %234 = sbr.rel (%p231) target = $region36
      $region35: #{tpu_custom_call.1} parent=5 // pred_region
        %s235 = ssub.s32 %s13, 1
        %s236 = sand.u32 %s66, 1
        %s237 = scalar_lea.sflag [#allocation5], %s236
        %s238 = sand.u32 %s66, 1
        %s239 = smul.addr %s238, 32
        %s240 = scalar_lea.vmem [#allocation4], %s239
        // Predicated region
        $region37: #{tpu_custom_call.1} parent=35 // pred_check
          %p241 = pneg %p79
        $region38: #{tpu_custom_call.1} parent=35 // pred_check_branch
          %243 = sbr.rel (%p241) target = $region40
        $region39: #{tpu_custom_call.1} parent=35 // pred_region
          %244 = dma.done %s237, 512
        $region40: #{tpu_custom_call.1} parent=35 // pred_fallthru
          _
        %p245 = scmp.lt.s32.totalorder %s22, 1
        %s246 = scalar_select %p245, %s22, 1
        %s247 = smul.addr %s246, 4
        %s248 = smul.addr %s247, 4
        %s249 = scalar_lea.vmem %s0, %s248
        %p250 = pneg %p51
        %p251 = pneg %p48
        %s252 = sand.u32 %s66, 1
        %s253 = scalar_lea.sflag [#allocation5], %s252
        %s254 = sand.u32 %s66, 1
        %s255 = smul.addr %s254, 32
        %s256 = scalar_lea.vmem [#allocation4], %s255
        %p257 = pneg %p79
        %p258 = pneg %p76
        %p259 = scmp.lt.s32.totalorder %s22, 1
        %s260 = scalar_select %p259, %s22, 1
        %s261 = smul.addr %s260, 8
        %s262 = scalar_lea.vmem %s2, %s261
        %p263 = pneg %p105
        %p264 = pneg %p102
        %s265 = smul.u32 2, %s23
        %p266 = scmp.lt.s32.totalorder %s22, 1
        %s267 = scalar_select %p266, %s22, 1
        %p268 = scmp.lt.s32.totalorder %s265, 1
        %s269 = scalar_select %p268, %s265, 1
        %s270 = smul.addr %s267, 2
        %s271 = sadd.s32 %s269, %s270
        %s272 = smul.addr %s271, 4
        %s273 = scalar_lea.vmem %s3, %s272
        %p274 = pneg %p133
        %p275 = pneg %p130
        %p276 = pneg %p159
        %p277 = pneg %p156
        %p278 = scmp.lt.s32.totalorder %s22, 1
        %s279 = scalar_select %p278, %s22, 1
        %s280 = smul.addr %s279, 4
        %s281 = scalar_lea.vmem %s4, %s280
        %p282 = scmp.lt.s32.totalorder %s22, 1
        %s283 = scalar_select %p282, %s22, 1
        %s284 = smul.addr %s283, 4
        %s285 = smul.addr %s284, 4
        %s286 = scalar_lea.vmem %s0, %s285
        %s287 = smul.u32 2, %s23
        %p288 = scmp.lt.s32.totalorder %s22, 1
        %s289 = scalar_select %p288, %s22, 1
        %s290 = smul.addr %s289, 8
        %s291 = scalar_lea.vmem %s2, %s290
        %s292 = smul.u32 2, %s23
        %p293 = scmp.lt.s32.totalorder %s22, 1
        %s294 = scalar_select %p293, %s22, 1
        %p295 = scmp.lt.s32.totalorder %s292, 1
        %s296 = scalar_select %p295, %s292, 1
        %s297 = smul.addr %s294, 2
        %s298 = sadd.s32 %s296, %s297
        %s299 = smul.addr %s298, 4
        %s300 = scalar_lea.vmem %s3, %s299
        %s301 = smul.u32 2, %s23
        %p302 = scmp.lt.s32.totalorder %s22, 1
        %s303 = scalar_select %p302, %s22, 1
        %s304 = smul.addr %s303, 4
        %s305 = scalar_lea.vmem %s4, %s304
        %p307 = scmp.eq.s32.totalorder %s23, 0
        // Predicated region
        $region41: #{tpu_custom_call.1} parent=35 // pred_check
          %p308 = pneg %p307
        $region42: #{tpu_custom_call.1} parent=35 // pred_check_branch
          %310 = sbr.rel (%p308) target = $region44
        $region43: #{tpu_custom_call.1} parent=35 // pred_region
          %311 = vst [vmem:[#allocation2] sm:$0x1] -inf
          %312 = vst [vmem:[#allocation3] sm:$0x3f] 0.0
        $region44: #{tpu_custom_call.1} parent=35 // pred_fallthru
          _
        %v313 = vld [vmem:[%s286] sm:$0xf]
        %v314 = vld [vmem:[%s286 + $0x4] sm:$0xf]
        %v315 = vld [vmem:[%s286 + $0x8] sm:$0xf]
        %v316 = vld [vmem:[%s286 + $0xc] sm:$0xf]
        %v317 = vld [vmem:[%s240] sm:$0xff]
        %v318 = vld [vmem:[%s240 + $0x8] sm:$0xff]
        %v319 = vld [vmem:[%s240 + $0x10] sm:$0xff]
        %v320 = vld [vmem:[%s240 + $0x18] sm:$0xff]
        %v321 = vld [vmem:[%s300] sm:$0x77]
        %v326 = vunpack.c.l.b16 %v317
        %v327 = vunpack.c.h.b16 %v317
        %v328 = vunpack.c.l.b16 %v318
        %v329 = vunpack.c.h.b16 %v318
        %v330 = vunpack.c.l.b16 %v319
        %v331 = vunpack.c.h.b16 %v319
        %v332 = vunpack.c.l.b16 %v320
        %v333 = vunpack.c.h.b16 %v320
        %v334 = vpack.c.b16 %v328, %v326
        %v335 = vpack.c.b16 %v329, %v327
        %v336 = vpack.c.b16 %v332, %v330
        %v337 = vpack.c.b16 %v333, %v331
        %342 = vxpose.xlu0.c.b16.start [1/8] %v334, 128
        %343 = vxpose.xlu0.c.b16.cont [2/8] %v336, 128
        %344 = vxpose.xlu0.c.b16.cont [3/8] 0, 128
        %345 = vxpose.xlu0.c.b16.cont [4/8] 0, 128
        %346 = vxpose.xlu0.c.b16.cont [5/8] 0, 128
        %347 = vxpose.xlu0.c.b16.cont [6/8] 0, 128
        %348 = vxpose.xlu0.c.b16.cont [7/8] 0, 128
        %349 = vxpose.xlu0.c.b16.end [8/8] 0, 128
        %v350 = vpop.trf.xlu0
        %v351 = vpop.trf.xlu0
        %v352 = vpop.trf.xlu0
        %v353 = vpop.trf.xlu0
        %v354 = vpop.trf.xlu0
        %v355 = vpop.trf.xlu0
        %v356 = vpop.trf.xlu0
        %v357 = vpop.trf.xlu0
        %358 = vxpose.xlu0.c.b16.start [1/8] %v335, 128
        %359 = vxpose.xlu0.c.b16.cont [2/8] %v337, 128
        %360 = vxpose.xlu0.c.b16.cont [3/8] 0, 128
        %361 = vxpose.xlu0.c.b16.cont [4/8] 0, 128
        %362 = vxpose.xlu0.c.b16.cont [5/8] 0, 128
        %363 = vxpose.xlu0.c.b16.cont [6/8] 0, 128
        %364 = vxpose.xlu0.c.b16.cont [7/8] 0, 128
        %365 = vxpose.xlu0.c.b16.end [8/8] 0, 128
        %v366 = vpop.trf.xlu0
        %v367 = vpop.trf.xlu0
        %v368 = vpop.trf.xlu0
        %v369 = vpop.trf.xlu0
        %v370 = vpop.trf.xlu0
        %v371 = vpop.trf.xlu0
        %v372 = vpop.trf.xlu0
        %v373 = vpop.trf.xlu0
        %v378 = vunpack.c.l.b16 %v313
        %v379 = vunpack.c.l.b16 %v314
        %v380 = vunpack.c.l.b16 %v315
        %v381 = vunpack.c.l.b16 %v316
        %v382 = vpack.c.b16 %v379, %v378
        %v383 = vpack.c.b16 %v381, %v380
        %vm386 = vcmask 261120
        %v388 = vsel %vm386, %v350, 0
        %v391 = vsel %vm386, %v351, 0
        %v394 = vsel %vm386, %v352, 0
        %v397 = vsel %vm386, %v353, 0
        %v400 = vsel %vm386, %v354, 0
        %v403 = vsel %vm386, %v355, 0
        %v406 = vsel %vm386, %v356, 0
        %v409 = vsel %vm386, %v357, 0
        %v412 = vsel %vm386, %v366, 0
        %v415 = vsel %vm386, %v367, 0
        %v418 = vsel %vm386, %v368, 0
        %v421 = vsel %vm386, %v369, 0
        %v424 = vsel %vm386, %v370, 0
        %v427 = vsel %vm386, %v371, 0
        %v430 = vsel %vm386, %v372, 0
        %v433 = vsel %vm386, %v373, 0
        %435 = vmatprep.subr.bf16.mxu0 0
        %436 = vmatpush1.bf16.msra.mxu0 0
        %437 = vmatprep.subr.bf16.mxu0 0
        %438 = vmatpush1.bf16.msra.mxu0 0
        %439 = vmatprep.subr.bf16.mxu0 0
        %440 = vmatpush1.bf16.msra.mxu0 0
        %441 = vmatprep.subr.bf16.mxu0 0
        %442 = vmatpush1.bf16.msra.mxu0 0
        %443 = vmatprep.subr.bf16.mxu0 0
        %444 = vmatpush1.bf16.msra.mxu0 0
        %445 = vmatprep.subr.bf16.mxu0 0
        %446 = vmatpush1.bf16.msra.mxu0 0
        %447 = vmatprep.subr.bf16.mxu0 0
        %448 = vmatpush1.bf16.msra.mxu0 %v383
        %449 = vmatprep.subr.bf16.mxu0 0
        %450 = vmatpush1.bf16.msra.mxu0 %v382
        %451 = vmatprep.subr.bf16.mxu0 0
        %452 = vmatpush2.bf16.msra.mxu0 0
        %453 = vmatprep.subr.bf16.mxu0 0
        %454 = vmatpush2.bf16.msra.mxu0 0
        %455 = vmatprep.subr.bf16.mxu0 0
        %456 = vmatpush2.bf16.msra.mxu0 0
        %457 = vmatprep.subr.bf16.mxu0 0
        %458 = vmatpush2.bf16.msra.mxu0 0
        %459 = vmatprep.subr.bf16.mxu0 0
        %460 = vmatpush2.bf16.msra.mxu0 0
        %461 = vmatprep.subr.bf16.mxu0 0
        %462 = vmatpush2.bf16.msra.mxu0 0
        %463 = vmatprep.subr.bf16.mxu0 0
        %464 = vmatpush2.bf16.msra.mxu0 0
        %465 = vmatprep.subr.bf16.mxu0 0
        %466 = vmatpush2.bf16.msra.mxu0 0
        %467 = vmatprep.mubr.bf16.mxu0 0
        %468 = vmatmul.mubr.bf16.gmra.mxu0 %v388
        %v469 = vpop.f32.mrf.mxu0
        %v470 = vadd.f32 0.0, %v469
        %v471 = vpop.f32.mrf.mxu0
        %v472 = vpop.f32.mrf.mxu0
        %v473 = vadd.f32 0.0, %v472
        %v474 = vpop.f32.mrf.mxu0
        %475 = vmatprep.mubr.bf16.mxu0 0
        %476 = vmatmul.mubr.bf16.gmra.mxu0 %v391
        %v477 = vpop.f32.mrf.mxu0
        %v478 = vadd.f32 0.0, %v477
        %v479 = vpop.f32.mrf.mxu0
        %v480 = vpop.f32.mrf.mxu0
        %v481 = vadd.f32 0.0, %v480
        %v482 = vpop.f32.mrf.mxu0
        %483 = vmatprep.mubr.bf16.mxu0 0
        %484 = vmatmul.mubr.bf16.gmra.mxu0 %v394
        %v485 = vpop.f32.mrf.mxu0
        %v486 = vadd.f32 0.0, %v485
        %v487 = vpop.f32.mrf.mxu0
        %v488 = vpop.f32.mrf.mxu0
        %v489 = vadd.f32 0.0, %v488
        %v490 = vpop.f32.mrf.mxu0
        %491 = vmatprep.mubr.bf16.mxu0 0
        %492 = vmatmul.mubr.bf16.gmra.mxu0 %v397
        %v493 = vpop.f32.mrf.mxu0
        %v494 = vadd.f32 0.0, %v493
        %v495 = vpop.f32.mrf.mxu0
        %v496 = vpop.f32.mrf.mxu0
        %v497 = vadd.f32 0.0, %v496
        %v498 = vpop.f32.mrf.mxu0
        %499 = vmatprep.mubr.bf16.mxu0 0
        %500 = vmatmul.mubr.bf16.gmra.mxu0 %v400
        %v501 = vpop.f32.mrf.mxu0
        %v502 = vadd.f32 0.0, %v501
        %v503 = vpop.f32.mrf.mxu0
        %v504 = vpop.f32.mrf.mxu0
        %v505 = vadd.f32 0.0, %v504
        %v506 = vpop.f32.mrf.mxu0
        %507 = vmatprep.mubr.bf16.mxu0 0
        %508 = vmatmul.mubr.bf16.gmra.mxu0 %v403
        %v509 = vpop.f32.mrf.mxu0
        %v510 = vadd.f32 0.0, %v509
        %v511 = vpop.f32.mrf.mxu0
        %v512 = vpop.f32.mrf.mxu0
        %v513 = vadd.f32 0.0, %v512
        %v514 = vpop.f32.mrf.mxu0
        %515 = vmatprep.mubr.bf16.mxu0 0
        %516 = vmatmul.mubr.bf16.gmra.mxu0 %v406
        %v517 = vpop.f32.mrf.mxu0
        %v518 = vadd.f32 0.0, %v517
        %v519 = vpop.f32.mrf.mxu0
        %v520 = vpop.f32.mrf.mxu0
        %v521 = vadd.f32 0.0, %v520
        %v522 = vpop.f32.mrf.mxu0
        %523 = vmatprep.mubr.bf16.mxu0 0
        %524 = vmatmul.mubr.bf16.gmra.mxu0 %v409
        %v525 = vpop.f32.mrf.mxu0
        %v526 = vadd.f32 0.0, %v525
        %v527 = vpop.f32.mrf.mxu0
        %v528 = vpop.f32.mrf.mxu0
        %v529 = vadd.f32 0.0, %v528
        %v530 = vpop.f32.mrf.mxu0
        %531 = vmatprep.mubr.bf16.mxu0 0
        %532 = vmatmul.mubr.bf16.gmra.mxu0 %v412
        %v533 = vpop.f32.mrf.mxu0
        %v534 = vadd.f32 0.0, %v533
        %v535 = vpop.f32.mrf.mxu0
        %v536 = vpop.f32.mrf.mxu0
        %v537 = vadd.f32 0.0, %v536
        %v538 = vpop.f32.mrf.mxu0
        %539 = vmatprep.mubr.bf16.mxu0 0
        %540 = vmatmul.mubr.bf16.gmra.mxu0 %v415
        %v541 = vpop.f32.mrf.mxu0
        %v542 = vadd.f32 0.0, %v541
        %v543 = vpop.f32.mrf.mxu0
        %v544 = vpop.f32.mrf.mxu0
        %v545 = vadd.f32 0.0, %v544
        %v546 = vpop.f32.mrf.mxu0
        %547 = vmatprep.mubr.bf16.mxu0 0
        %548 = vmatmul.mubr.bf16.gmra.mxu0 %v418
        %v549 = vpop.f32.mrf.mxu0
        %v550 = vadd.f32 0.0, %v549
        %v551 = vpop.f32.mrf.mxu0
        %v552 = vpop.f32.mrf.mxu0
        %v553 = vadd.f32 0.0, %v552
        %v554 = vpop.f32.mrf.mxu0
        %555 = vmatprep.mubr.bf16.mxu0 0
        %556 = vmatmul.mubr.bf16.gmra.mxu0 %v421
        %v557 = vpop.f32.mrf.mxu0
        %v558 = vadd.f32 0.0, %v557
        %v559 = vpop.f32.mrf.mxu0
        %v560 = vpop.f32.mrf.mxu0
        %v561 = vadd.f32 0.0, %v560
        %v562 = vpop.f32.mrf.mxu0
        %563 = vmatprep.mubr.bf16.mxu0 0
        %564 = vmatmul.mubr.bf16.gmra.mxu0 %v424
        %v565 = vpop.f32.mrf.mxu0
        %v566 = vadd.f32 0.0, %v565
        %v567 = vpop.f32.mrf.mxu0
        %v568 = vpop.f32.mrf.mxu0
        %v569 = vadd.f32 0.0, %v568
        %v570 = vpop.f32.mrf.mxu0
        %571 = vmatprep.mubr.bf16.mxu0 0
        %572 = vmatmul.mubr.bf16.gmra.mxu0 %v427
        %v573 = vpop.f32.mrf.mxu0
        %v574 = vadd.f32 0.0, %v573
        %v575 = vpop.f32.mrf.mxu0
        %v576 = vpop.f32.mrf.mxu0
        %v577 = vadd.f32 0.0, %v576
        %v578 = vpop.f32.mrf.mxu0
        %579 = vmatprep.mubr.bf16.mxu0 0
        %580 = vmatmul.mubr.bf16.gmra.mxu0 %v430
        %v581 = vpop.f32.mrf.mxu0
        %v582 = vadd.f32 0.0, %v581
        %v583 = vpop.f32.mrf.mxu0
        %v584 = vpop.f32.mrf.mxu0
        %v585 = vadd.f32 0.0, %v584
        %v586 = vpop.f32.mrf.mxu0
        %587 = vmatprep.mubr.bf16.mxu0 0
        %588 = vmatmul.mubr.bf16.gmra.mxu0 %v433
        %v589 = vpop.f32.mrf.mxu0
        %v590 = vadd.f32 0.0, %v589
        %v591 = vpop.f32.mrf.mxu0
        %v592 = vpop.f32.mrf.mxu0
        %v593 = vadd.f32 0.0, %v592
        %v594 = vpop.f32.mrf.mxu0
        %595 = vdwg.mxu0
        %v596 = vld [vmem:[#allocation2] sm:$0x1]
        %v597 = vmax.f32 %v470, %v486
        %v598 = vmax.f32 %v473, %v489
        %v599 = vmax.f32 %v478, %v494
        %v600 = vmax.f32 %v481, %v497
        %v601 = vmax.f32 %v597, %v502
        %v602 = vmax.f32 %v598, %v505
        %v603 = vmax.f32 %v599, %v510
        %v604 = vmax.f32 %v600, %v513
        %v605 = vmax.f32 %v601, %v518
        %v606 = vmax.f32 %v602, %v521
        %v607 = vmax.f32 %v603, %v526
        %v608 = vmax.f32 %v604, %v529
        %v609 = vmax.f32 %v605, %v534
        %v610 = vmax.f32 %v606, %v537
        %v611 = vmax.f32 %v607, %v542
        %v612 = vmax.f32 %v608, %v545
        %v613 = vmax.f32 %v609, %v550
        %v614 = vmax.f32 %v610, %v553
        %v615 = vmax.f32 %v611, %v558
        %v616 = vmax.f32 %v612, %v561
        %v617 = vmax.f32 %v613, %v566
        %v618 = vmax.f32 %v614, %v569
        %v619 = vmax.f32 %v615, %v574
        %v620 = vmax.f32 %v616, %v577
        %v621 = vmax.f32 %v617, %v582
        %v622 = vmax.f32 %v618, %v585
        %v623 = vmax.f32 %v619, %v590
        %v624 = vmax.f32 %v620, %v593
        %v625 = vmax.f32 %v621, %v622
        %v626 = vmax.f32 %v623, %v624
        %v627 = vmax.f32 %v625, %v626
        %v628 = vrot.slane %v627, 4
        %v629 = vmax.f32 %v627, %v628
        %v630 = vrot.slane %v629, 2
        %v631 = vmax.f32 %v629, %v630
        %v632 = vrot.slane %v631, 1
        %v633 = vmax.f32 %v631, %v632
        %v634 = vmax.f32 %v596, %v633
        %v635 = vsub.f32 %v596, %v634
        %v636 = vpow.pop %v635
        %v638 = vlaneseq
        %v639 = vshrl.u32 %v638, 7
        %v640 = vsub.s32 0, %v639
        %v641 = vrot.slane %v634, %v640
        %v643 = vsub.f32 %v470, %v641
        %v644 = vsub.f32 %v473, %v641
        %v645 = vsub.f32 %v478, %v641
        %v646 = vsub.f32 %v481, %v641
        %v647 = vsub.f32 %v486, %v641
        %v648 = vsub.f32 %v489, %v641
        %v649 = vsub.f32 %v494, %v641
        %v650 = vsub.f32 %v497, %v641
        %v651 = vsub.f32 %v502, %v641
        %v652 = vsub.f32 %v505, %v641
        %v653 = vsub.f32 %v510, %v641
        %v654 = vsub.f32 %v513, %v641
        %v655 = vsub.f32 %v518, %v641
        %v656 = vsub.f32 %v521, %v641
        %v657 = vsub.f32 %v526, %v641
        %v658 = vsub.f32 %v529, %v641
        %v659 = vsub.f32 %v534, %v641
        %v660 = vsub.f32 %v537, %v641
        %v661 = vsub.f32 %v542, %v641
        %v662 = vsub.f32 %v545, %v641
        %v663 = vsub.f32 %v550, %v641
        %v664 = vsub.f32 %v553, %v641
        %v665 = vsub.f32 %v558, %v641
        %v666 = vsub.f32 %v561, %v641
        %v667 = vsub.f32 %v566, %v641
        %v668 = vsub.f32 %v569, %v641
        %v669 = vsub.f32 %v574, %v641
        %v670 = vsub.f32 %v577, %v641
        %v671 = vsub.f32 %v582, %v641
        %v672 = vsub.f32 %v585, %v641
        %v673 = vsub.f32 %v590, %v641
        %v674 = vsub.f32 %v593, %v641
        %v675 = vpow.pop %v643
        %v676 = vpow.pop %v644
        %v677 = vpow.pop %v645
        %v678 = vpow.pop %v646
        %v679 = vpow.pop %v647
        %v680 = vpow.pop %v648
        %v681 = vpow.pop %v649
        %v682 = vpow.pop %v650
        %v683 = vpow.pop %v651
        %v684 = vpow.pop %v652
        %v685 = vpow.pop %v653
        %v686 = vpow.pop %v654
        %v687 = vpow.pop %v655
        %v688 = vpow.pop %v656
        %v689 = vpow.pop %v657
        %v690 = vpow.pop %v658
        %v691 = vpow.pop %v659
        %v692 = vpow.pop %v660
        %v693 = vpow.pop %v661
        %v694 = vpow.pop %v662
        %v695 = vpow.pop %v663
        %v696 = vpow.pop %v664
        %v697 = vpow.pop %v665
        %v698 = vpow.pop %v666
        %v699 = vpow.pop %v667
        %v700 = vpow.pop %v668
        %v701 = vpow.pop %v669
        %v702 = vpow.pop %v670
        %v703 = vpow.pop %v671
        %v704 = vpow.pop %v672
        %v705 = vpow.pop %v673
        %v706 = vpow.pop %v674
        %v707 = vpack.c.bf16 %v676, %v675
        %v708 = vpack.c.bf16 %v678, %v677
        %v709 = vpack.c.bf16 %v680, %v679
        %v710 = vpack.c.bf16 %v682, %v681
        %v711 = vpack.c.bf16 %v684, %v683
        %v712 = vpack.c.bf16 %v686, %v685
        %v713 = vpack.c.bf16 %v688, %v687
        %v714 = vpack.c.bf16 %v690, %v689
        %v715 = vpack.c.bf16 %v692, %v691
        %v716 = vpack.c.bf16 %v694, %v693
        %v717 = vpack.c.bf16 %v696, %v695
        %v718 = vpack.c.bf16 %v698, %v697
        %v719 = vpack.c.bf16 %v700, %v699
        %v720 = vpack.c.bf16 %v702, %v701
        %v721 = vpack.c.bf16 %v704, %v703
        %v722 = vpack.c.bf16 %v706, %v705
        %v723 = vld [vmem:[#allocation3] sm:$0x3f]
        %v725 = vlaneseq
        %v726 = vshrl.u32 %v725, 7
        %v727 = vsub.s32 0, %v726
        %v728 = vrot.slane %v636, %v727
        %v730 = vmul.f32 %v728, %v723
        %v732 = vunpack.c.l.b16 %v321
        %v733 = vunpack.c.h.b16 %v321
        %v734 = vpack.c.b16 %v732, %v732
        %v735 = vpack.c.b16 %v733, %v733
        %738 = vmatprep.subr.bf16.mxu0 0
        %739 = vmatpush1.bf16.msra.mxu0 %v714
        %740 = vmatprep.subr.bf16.mxu0 0
        %741 = vmatpush1.bf16.msra.mxu0 %v713
        %742 = vmatprep.subr.bf16.mxu0 0
        %743 = vmatpush1.bf16.msra.mxu0 %v712
        %744 = vmatprep.subr.bf16.mxu0 0
        %745 = vmatpush1.bf16.msra.mxu0 %v711
        %746 = vmatprep.subr.bf16.mxu0 0
        %747 = vmatpush1.bf16.msra.mxu0 %v710
        %748 = vmatprep.subr.bf16.mxu0 0
        %749 = vmatpush1.bf16.msra.mxu0 %v709
        %750 = vmatprep.subr.bf16.mxu0 0
        %751 = vmatpush1.bf16.msra.mxu0 %v708
        %752 = vmatprep.subr.bf16.mxu0 0
        %753 = vmatpush1.bf16.msra.mxu0 %v707
        %754 = vmatprep.subr.bf16.mxu0 0
        %755 = vmatpush2.bf16.msra.mxu0 %v722
        %756 = vmatprep.subr.bf16.mxu0 0
        %757 = vmatpush2.bf16.msra.mxu0 %v721
        %758 = vmatprep.subr.bf16.mxu0 0
        %759 = vmatpush2.bf16.msra.mxu0 %v720
        %760 = vmatprep.subr.bf16.mxu0 0
        %761 = vmatpush2.bf16.msra.mxu0 %v719
        %762 = vmatprep.subr.bf16.mxu0 0
        %763 = vmatpush2.bf16.msra.mxu0 %v718
        %764 = vmatprep.subr.bf16.mxu0 0
        %765 = vmatpush2.bf16.msra.mxu0 %v717
        %766 = vmatprep.subr.bf16.mxu0 0
        %767 = vmatpush2.bf16.msra.mxu0 %v716
        %768 = vmatprep.subr.bf16.mxu0 0
        %769 = vmatpush2.bf16.msra.mxu0 %v715
        %770 = vmatprep.mubr.bf16.mxu0 %v735
        %771 = vmatmul.mubr.bf16.gmra.mxu0 %v734
        %v772 = vpop.f32.mrf.mxu0
        %v773 = vadd.f32 0.0, %v772
        %v774 = vpop.f32.mrf.mxu0
        %v775 = vpop.f32.mrf.mxu0
        %v776 = vpop.f32.mrf.mxu0
        %777 = vdwg.mxu0
        %v778 = vadd.f32 %v730, %v773
        %779 = vst [vmem:[#allocation3] sm:$0x3f] %v778
        %780 = vst [vmem:[#allocation2] sm:$0x1] %v634
        // Predicated region
        $region45: #{tpu_custom_call.1} parent=35 // pred_check
          %p781 = pneg %p307
        $region46: #{tpu_custom_call.1} parent=35 // pred_check_branch
          %783 = sbr.rel (%p781) target = $region48
        $region47: #{tpu_custom_call.1} parent=35 // pred_region
          %v784 = vld [vmem:[%s291] sm:$0x1f]
          %v785 = vld [vmem:[#allocation3 + $0x5] sm:$0x1]
          %v786 = vrcp.pop %v785
          %v787 = vld [vmem:[#allocation3] sm:$0x1f]
          %v788 = vlaneseq
          %v789 = vshrl.u32 %v788, 7
          %v790 = vsub.s32 0, %v789
          %v791 = vrot.slane %v786, %v790
          %v792 = vmul.f32 %v787, %v791
          %v793 = vadd.f32 %v784, %v792
          %v794 = vmul.f32 %v793, 0.5
          %v795 = vxor.u32 %v794, 2147483648
          %v796 = vmul.f32 %v795, 1.442695
          %v797 = vpow.pop %v796
          %v798 = vadd.f32 %v797, 1.0
          %v799 = vrcp.pop %v798
          %v800 = vmul.f32 1.0, %v799
          %v802 = vrot.slane %v800, 1
          %v804 = vmul.f32 %v800, %v802
          %vm805 = vcmask 1043459
          %v806 = vsel %vm805, %v804, inf
          %807 = vmin.xlane.f32.xlu0 %v806
          %v808 = vpop.xlane.xlu0 %807
          %v809 = vsel %vm805, %v804, -inf
          %810 = vmax.xlane.f32.xlu0 %v809
          %v811 = vpop.xlane.xlu0 %810
          %v812 = vsub.f32 %v804, %v808
          %v813 = vsub.f32 %v811, %v808
          %v814 = vmax.f32 %v813, 1e-06
          %v815 = vrcp.pop %v814
          %v816 = vmul.f32 %v812, %v815
          %vm817 = vcmask 1042432
          %v818 = vsel %vm817, %v784, 0.0
          %819 = vadd.xlane.f32.xlu0 %v818
          %v820 = vpop.xlane.xlu0 %819
          %v821 = vmul.f32 %v820, 0.0078125
          %v822 = vsel %vm817, %v792, 0.0
          %823 = vadd.xlane.f32.xlu0 %v822
          %v824 = vpop.xlane.xlu0 %823
          %v825 = vmul.f32 %v824, 0.0078125
          %v826 = vsub.f32 %v784, %v821
          %v827 = vsub.f32 %v792, %v825
          %v828 = vlaneseq
          %v829 = vshrl.u32 %v828, 7
          %v830 = vsub.s32 3, %v829
          %v831 = vrot.slane %v816, %v830
          %v832 = vmul.f32 %v826, %v831
          %833 = vmatprep.subr.mxu0 0.0
          %834 = vmatpush1.xpose.msra.mxu0 0.0
          %835 = vmatprep.subr.mxu0 0.0
          %836 = vmatpush1.xpose.msra.mxu0 0.0
          %837 = vmatprep.subr.mxu0 0.0
          %838 = vmatpush1.xpose.msra.mxu0 0.0
          %839 = vmatprep.subr.mxu0 0.0
          %840 = vmatpush1.xpose.msra.mxu0 0.0
          %841 = vmatprep.subr.mxu0 0.0
          %842 = vmatpush1.xpose.msra.mxu0 0.0
          %843 = vmatprep.subr.mxu0 0.0
          %844 = vmatpush1.xpose.msra.mxu0 0.0
          %845 = vmatprep.subr.mxu0 0.0
          %846 = vmatpush1.xpose.msra.mxu0 0.0
          %847 = vmatprep.subr.mxu0 0.0
          %848 = vmatpush1.xpose.msra.mxu0 0.0
          %849 = vmatprep.subr.mxu0 0.0
          %850 = vmatpush1.xpose.msra.mxu0 0.0
          %851 = vmatprep.subr.mxu0 0.0
          %852 = vmatpush1.xpose.msra.mxu0 0.0
          %853 = vmatprep.subr.mxu0 0.0
          %854 = vmatpush1.xpose.msra.mxu0 0.0
          %855 = vmatprep.subr.mxu0 0.0
          %856 = vmatpush1.xpose.msra.mxu0 0.0
          %857 = vmatprep.subr.mxu0 0.0
          %858 = vmatpush1.xpose.msra.mxu0 0.0
          %859 = vmatprep.subr.mxu0 0.0
          %860 = vmatpush1.xpose.msra.mxu0 0.0
          %861 = vmatprep.subr.mxu0 0.0
          %862 = vmatpush1.xpose.msra.mxu0 0.0
          %863 = vmatprep.subr.mxu0 0.0
          %864 = vmatpush1.xpose.msra.mxu0 %v827
          %865 = vmatprep.subr.mxu0 0.0
          %866 = vmatpush2.xpose.msra.mxu0 0.0
          %867 = vmatprep.subr.mxu0 0.0
          %868 = vmatpush2.xpose.msra.mxu0 0.0
          %869 = vmatprep.subr.mxu0 0.0
          %870 = vmatpush2.xpose.msra.mxu0 0.0
          %871 = vmatprep.subr.mxu0 0.0
          %872 = vmatpush2.xpose.msra.mxu0 0.0
          %873 = vmatprep.subr.mxu0 0.0
          %874 = vmatpush2.xpose.msra.mxu0 0.0
          %875 = vmatprep.subr.mxu0 0.0
          %876 = vmatpush2.xpose.msra.mxu0 0.0
          %877 = vmatprep.subr.mxu0 0.0
          %878 = vmatpush2.xpose.msra.mxu0 0.0
          %879 = vmatprep.subr.mxu0 0.0
          %880 = vmatpush2.xpose.msra.mxu0 0.0
          %881 = vmatprep.subr.mxu0 0.0
          %882 = vmatpush2.xpose.msra.mxu0 0.0
          %883 = vmatprep.subr.mxu0 0.0
          %884 = vmatpush2.xpose.msra.mxu0 0.0
          %885 = vmatprep.subr.mxu0 0.0
          %886 = vmatpush2.xpose.msra.mxu0 0.0
          %887 = vmatprep.subr.mxu0 0.0
          %888 = vmatpush2.xpose.msra.mxu0 0.0
          %889 = vmatprep.subr.mxu0 0.0
          %890 = vmatpush2.xpose.msra.mxu0 0.0
          %891 = vmatprep.subr.mxu0 0.0
          %892 = vmatpush2.xpose.msra.mxu0 0.0
          %893 = vmatprep.subr.mxu0 0.0
          %894 = vmatpush2.xpose.msra.mxu0 0.0
          %895 = vmatprep.subr.mxu0 0.0
          %896 = vmatpush2.xpose.msra.mxu0 0.0
          %897 = vmatprep.mubr.f32.mxu0 0.0
          %898 = vmatmul.mubr.f32.gmra.mxu0 %v832
          %v899 = vpop.f32.mrf.mxu0
          %v900 = vadd.f32 0.0, %v899
          %v901 = vpop.f32.mrf.mxu0
          %902 = vdwg.mxu0
          %vm903 = vcmask 18432
          %904 = vst.msk [vmem:[%s305] sm:$0x7] %vm903, %v900
          %vm905 = vcmask 26648
          %906 = vst.msk [vmem:[%s305] sm:$0x7] %vm905, %v821
          %vm907 = vcmask 34848
          %908 = vst.msk [vmem:[%s305] sm:$0x7] %vm907, %v825
        $region48: #{tpu_custom_call.1} parent=35 // pred_fallthru
          _
        %p909 = scmp.lt.s32.totalorder %s22, 1
        %s910 = scalar_select %p909, %s22, 1
        %s911 = smul.addr %s910, 4
        %s912 = scalar_lea.vmem %s4, %s911
        // Predicated region
        $region49: #{tpu_custom_call.1} parent=35 // pred_check
          %p913 = pneg %p156
        $region50: #{tpu_custom_call.1} parent=35 // pred_check_branch
          %915 = sbr.rel (%p913) target = $region52
        $region51: #{tpu_custom_call.1} parent=35 // pred_region
          _
        $region52: #{tpu_custom_call.1} parent=35 // pred_fallthru
          _
      $region36: #{tpu_custom_call.1} parent=5 // pred_fallthru
        _
      %p916 = scmp.le.s32.totalorder 2, %s13
      // Predicated region
      $region53: #{tpu_custom_call.1} parent=5 // pred_check
        %p917 = pneg %p916
      $region54: #{tpu_custom_call.1} parent=5 // pred_check_branch
        %919 = sbr.rel (%p917) target = $region56
      $region55: #{tpu_custom_call.1} parent=5 // pred_region
        %s920 = ssub.s32 %s13, 2
        // Predicated region
        $region57: #{tpu_custom_call.1} parent=55 // pred_check
          %p921 = pneg %p162
        $region58: #{tpu_custom_call.1} parent=55 // pred_check_branch
          %923 = sbr.rel (%p921) target = $region60
        $region59: #{tpu_custom_call.1} parent=55 // pred_region
          %p924 = scmp.lt.s32.totalorder %s24, 1
          %s925 = scalar_select %p924, %s24, 1
          %s926 = smul.addr %s925, 4
          %s927 = scalar_lea.vmem %s4, %s926
        $region60: #{tpu_custom_call.1} parent=55 // pred_fallthru
          _
      $region56: #{tpu_custom_call.1} parent=5 // pred_fallthru
        _
    $region6: #{tpu_custom_call.1} parent=1 // loop_footer
      %s17 = sadd.s32 1, %s13
    $region7: #{tpu_custom_call.1} parent=1 // loop_footer_branch
      %12 = sbr.rel target = $region3
    $region8: #{tpu_custom_call.1} parent=1 // loop_exit
      _
    %928 = vsyncpa [#allocation5], 1
    %s929 = scalar_lea.sflag [#allocation5], 1
    %930 = vsyncpa %s929, 1

</llo_original>
